<compile_context>
chip_gen: v7x
topology: tpu7x:2x2x1
jax: 0.10.0
libtpu: 0.0.40
codegen_flags: <defaults>
</compile_context>

<pallas_src>
import functools

import jax
import jax.numpy as jnp
from jax.experimental import pallas as pl
from jax.experimental.pallas import tpu as pltpu

EPS = 1e-5


def _to_bf16(w):
    # int8 / bf16 / f32 weights all become bf16 MXU operands.  Going through f32 keeps
    # the conversion on well-supported lowering paths; for bf16 inputs it is exact.
    return w.astype(jnp.float32).astype(jnp.bfloat16)


# ----------------------------------------------------------------------------------
# Small-batch path: single gridless fused kernel (whole batch resident in VMEM).
# ----------------------------------------------------------------------------------
def _drl_fused_kernel(w1_ref, w2_ref, p1_ref, p2_ref, x_ref, o_ref):
    xb = x_ref[...].astype(jnp.bfloat16)                                 # (B, 512) bf16

    # conv1 (1x1 Conv1d == matmul); bias + per-out-channel weight scale absorbed by BN1
    y1 = jnp.dot(xb, _to_bf16(w1_ref[...]), preferred_element_type=jnp.float32)

    # BN1 (training mode, biased var), one-pass sums
    mean1 = jnp.mean(y1, axis=0, keepdims=True)
    msq1 = jnp.mean(y1 * y1, axis=0, keepdims=True)
    var1 = jnp.maximum(msq1 - mean1 * mean1, 0.0)
    y1 = (y1 - mean1) * jax.lax.rsqrt(var1 + EPS)
    y1 = y1 * p1_ref[0:1, :] + p1_ref[1:2, :]

    # PReLU(512), then a single f32->bf16 cast of h
    alpha = p1_ref[2:3, :]
    h = jnp.where(y1 > 0, y1, alpha * y1).astype(jnp.bfloat16)

    # conv2; bias + weight scale absorbed by BN2
    y2 = jnp.dot(h, _to_bf16(w2_ref[...]), preferred_element_type=jnp.float32)

    # BN2 (training mode)
    mean2 = jnp.mean(y2, axis=0, keepdims=True)
    msq2 = jnp.mean(y2 * y2, axis=0, keepdims=True)
    var2 = jnp.maximum(msq2 - mean2 * mean2, 0.0)
    y2 = (y2 - mean2) * jax.lax.rsqrt(var2 + EPS)
    o_ref[...] = (y2 * p2_ref[0:1, :] + p2_ref[1:2, :]).astype(o_ref.dtype)


def _drl_forward_fused(x, kp):
    B = x.shape[0]
    Dp = kp["w2"].shape[1]
    vmem = lambda: pl.BlockSpec(memory_space=pltpu.MemorySpace.VMEM)
    return pl.pallas_call(
        _drl_fused_kernel,
        out_shape=jax.ShapeDtypeStruct((B, Dp), jnp.float32),
        in_specs=[vmem() for _ in range(5)],
        out_specs=vmem(),
        # Explicit budget; the fused path is only taken for batches whose f32
        # intermediates fit comfortably within this on all chips (incl. v7x 64 MiB VMEM).
        compiler_params=pltpu.CompilerParams(vmem_limit_bytes=48 * 1024 * 1024),
    )(kp["w1"], kp["w2"], kp["p1"], kp["p2"], x)   # weights first -> their DMAs issue first


# ----------------------------------------------------------------------------------
# Large-batch path: batch-tiled, weight-resident, BN stats accumulated across the grid.
# ----------------------------------------------------------------------------------
def _conv1_stats_kernel(w1_ref, x_ref, y1_ref, sum_ref, ssq_ref):
    i = pl.program_id(0)
    y1 = jnp.dot(x_ref[...].astype(jnp.bfloat16), _to_bf16(w1_ref[...]),
                 preferred_element_type=jnp.float32)
    y1_ref[...] = y1
    # Zero-padded rows produce exactly-zero y1 (no conv bias), so no masking is needed.
    ps = jnp.sum(y1, axis=0, keepdims=True)
    pq = jnp.sum(y1 * y1, axis=0, keepdims=True)

    @pl.when(i == 0)
    def _():
        sum_ref[...] = ps
        ssq_ref[...] = pq

    @pl.when(i > 0)
    def _():
        sum_ref[...] += ps
        ssq_ref[...] += pq


def _bn1_prelu_conv2_kernel(true_b, bt, w2_ref, bn1_ref, y1_ref, y2_ref, sum_ref, ssq_ref):
    i = pl.program_id(0)
    a1 = bn1_ref[0:1, :]
    b1 = bn1_ref[1:2, :]
    alpha = bn1_ref[2:3, :]
    y1 = y1_ref[...] * a1 + b1
    h = jnp.where(y1 > 0, y1, alpha * y1).astype(jnp.bfloat16)
    y2 = jnp.dot(h, _to_bf16(w2_ref[...]), preferred_element_type=jnp.float32)
    y2_ref[...] = y2

    if true_b % bt != 0:
        # Padded rows are no longer zero after BN1's affine -> mask them out of BN2 sums.
        rows = i * bt + jax.lax.broadcasted_iota(jnp.int32, y2.shape, 0)
        y2s = jnp.where(rows < true_b, y2, 0.0)
    else:
        y2s = y2
    ps = jnp.sum(y2s, axis=0, keepdims=True)
    pq = jnp.sum(y2s * y2s, axis=0, keepdims=True)

    @pl.when(i == 0)
    def _():
        sum_ref[...] = ps
        ssq_ref[...] = pq

    @pl.when(i > 0)
    def _():
        sum_ref[...] += ps
        ssq_ref[...] += pq


def _bn2_kernel(bn2_ref, y2_ref, o_ref):
    o_ref[...] = (y2_ref[...] * bn2_ref[0:1, :] + bn2_ref[1:2, :]).astype(o_ref.dtype)


def _drl_forward_tiled(x, kp, batch_tile):
    B, C = x.shape
    Dp = kp["w2"].shape[1]
    BT = batch_tile
    Bp = ((B + BT - 1) // BT) * BT
    nb = Bp // BT
    if Bp != B:
        x = jnp.pad(x, ((0, Bp - B), (0, 0)))   # zero rows

    arb = pltpu.CompilerParams(dimension_semantics=("arbitrary",))

    # pass 1: conv1 per batch tile (w1 resident), accumulate BN1 sum / sum-of-squares
    y1, s1, q1 = pl.pallas_call(
        _conv1_stats_kernel,
        grid=(nb,),
        in_specs=[pl.BlockSpec((C, C), lambda i: (0, 0)),
                  pl.BlockSpec((BT, C), lambda i: (i, 0))],
        out_specs=[pl.BlockSpec((BT, C), lambda i: (i, 0)),
                   pl.BlockSpec((1, C), lambda i: (0, 0)),
                   pl.BlockSpec((1, C), lambda i: (0, 0))],
        out_shape=[jax.ShapeDtypeStruct((Bp, C), jnp.float32),
                   jax.ShapeDtypeStruct((1, C), jnp.float32),
                   jax.ShapeDtypeStruct((1, C), jnp.float32)],
        compiler_params=arb,
    )(kp["w1"], x)

    # fold BN1 into a per-channel affine (tiny O(C) work stays in plain JAX)
    mean1 = s1 / B
    var1 = jnp.maximum(q1 / B - mean1 * mean1, 0.0)
    a1 = kp["p1"][0:1] * jax.lax.rsqrt(var1 + EPS)
    b1 = kp["p1"][1:2] - mean1 * a1
    bn1 = jnp.concatenate([a1, b1, kp["p1"][2:3]], axis=0)          # (3, C)

    # pass 2: BN1 affine + PReLU + conv2 (w2 resident), accumulate BN2 sums
    y2, s2, q2 = pl.pallas_call(
        functools.partial(_bn1_prelu_conv2_kernel, B, BT),
        grid=(nb,),
        in_specs=[pl.BlockSpec((C, Dp), lambda i: (0, 0)),
                  pl.BlockSpec((3, C), lambda i: (0, 0)),
                  pl.BlockSpec((BT, C), lambda i: (i, 0))],
        out_specs=[pl.BlockSpec((BT, Dp), lambda i: (i, 0)),
                   pl.BlockSpec((1, Dp), lambda i: (0, 0)),
                   pl.BlockSpec((1, Dp), lambda i: (0, 0))],
        out_shape=[jax.ShapeDtypeStruct((Bp, Dp), jnp.float32),
                   jax.ShapeDtypeStruct((1, Dp), jnp.float32),
                   jax.ShapeDtypeStruct((1, Dp), jnp.float32)],
        compiler_params=arb,
    )(kp["w2"], bn1, y1)

    mean2 = s2 / B
    var2 = jnp.maximum(q2 / B - mean2 * mean2, 0.0)
    a2 = kp["p2"][0:1] * jax.lax.rsqrt(var2 + EPS)
    b2 = kp["p2"][1:2] - mean2 * a2
    bn2 = jnp.concatenate([a2, b2], axis=0)                         # (2, Dp)

    # pass 3: BN2 normalize; purely elementwise -> batch axis can run core-parallel (v7x)
    out = pl.pallas_call(
        _bn2_kernel,
        grid=(nb,),
        in_specs=[pl.BlockSpec((2, Dp), lambda i: (0, 0)),
                  pl.BlockSpec((BT, Dp), lambda i: (i, 0))],
        out_specs=pl.BlockSpec((BT, Dp), lambda i: (i, 0)),
        out_shape=jax.ShapeDtypeStruct((Bp, Dp), jnp.float32),
        compiler_params=pltpu.CompilerParams(dimension_semantics=("parallel",)),
    )(bn2, y2)

    D = kp["dim"]
    return out[:B, :D]


def drl_forward(x, kp, *, batch_tile=256, fused_max_b=2048):
    """x: (B, 512) float32.  kp: output of pack_params.  Returns (B, D) float32."""
    if x.shape[0] <= fused_max_b:
        out = _drl_forward_fused(x, kp)
        D = kp["dim"]
        return out if D == out.shape[1] else out[:, :D]
    return _drl_forward_tiled(x, kp, batch_tile)


# ----------------------------------------------------------------------------------
# Parameter packing / quantization
# ----------------------------------------------------------------------------------
def _quantize_per_out_channel(w):
    """Symmetric int8 quantization with a per-OUTPUT-channel (per-column) scale.
    The scale itself is never needed in the kernel: a per-output-channel rescaling
    of a matmul feeding a training-mode BatchNorm is absorbed exactly by the BN."""
    amax = jnp.max(jnp.abs(w), axis=0, keepdims=True)
    scale = jnp.where(amax > 0, amax / 127.0, 1.0)
    return jnp.clip(jnp.round(w / scale), -127, 127).astype(jnp.int8)


def pack_params(params, weight_dtype=jnp.int8):
    """PyTorch-style f32 params -> kernel layout: int8 (or bf16/f32) weights, packed
    per-channel slabs, D padded to a multiple of 128 lanes (lane-dense output)."""
    D = params["w2_t"].shape[1]
    Dp = ((D + 127) // 128) * 128

    w1 = params["w1_t"]                                    # (512, 512) (in, out)
    w2 = params["w2_t"]                                    # (512, D)
    g2, b2 = params["gamma2"], params["beta2"]
    if Dp != D:
        pad = Dp - D
        w2 = jnp.pad(w2, ((0, 0), (0, pad)))
        g2 = jnp.pad(g2, ((0, 0), (0, pad)), constant_values=1.0)
        b2 = jnp.pad(b2, ((0, 0), (0, pad)))

    if weight_dtype == jnp.int8:
        w1 = _quantize_per_out_channel(w1)
        w2 = _quantize_per_out_channel(w2)
    else:
        w1 = w1.astype(weight_dtype)
        w2 = w2.astype(weight_dtype)

    p1 = jnp.concatenate([params["gamma1"], params["beta1"], params["alpha"]], axis=0)
    p2 = jnp.concatenate([g2, b2], axis=0)
    return {"w1": w1, "w2": w2, "p1": p1, "p2": p2, "dim": D}


def init_params(key, dimensionality):
    """Deterministic synthetic parameters matching the PyTorch module's shapes (f32)."""
    k1, k2, k3, k4 = jax.random.split(key, 4)
    c_in = 512
    w1 = jax.random.normal(k1, (c_in, c_in), jnp.float32) * 0.02   # Conv1d(512,512,1).T
    b1 = jax.random.normal(k2, (1, c_in), jnp.float32) * 0.02
    w2 = jax.random.normal(k3, (c_in, dimensionality), jnp.float32) * 0.02
    b2 = jax.random.normal(k4, (1, dimensionality), jnp.float32) * 0.02
    return {
        "w1_t": w1, "b1": b1,
        "gamma1": jnp.ones((1, c_in), jnp.float32),
        "beta1": jnp.zeros((1, c_in), jnp.float32),
        "alpha": jnp.full((1, c_in), 0.25, jnp.float32),   # PReLU init
        "w2_t": w2, "b2": b2,
        "gamma2": jnp.ones((1, dimensionality), jnp.float32),
        "beta2": jnp.zeros((1, dimensionality), jnp.float32),
    }


def drl_reference(x, params):
    """Pure-JAX f32 reference with exact PyTorch semantics (conv biases, training BN)."""
    y1 = x @ params["w1_t"] + params["b1"]
    m1 = y1.mean(0, keepdims=True)
    v1 = ((y1 - m1) ** 2).mean(0, keepdims=True)
    y1 = (y1 - m1) / jnp.sqrt(v1 + EPS) * params["gamma1"] + params["beta1"]
    h = jnp.where(y1 > 0, y1, params["alpha"] * y1)
    y2 = h @ params["w2_t"] + params["b2"]
    m2 = y2.mean(0, keepdims=True)
    v2 = ((y2 - m2) ** 2).mean(0, keepdims=True)
    return (y2 - m2) / jnp.sqrt(v2 + EPS) * params["gamma2"] + params["beta2"]


if __name__ == "__main__":
    key = jax.random.PRNGKey(0)
    kx, kx2, kp = jax.random.split(key, 3)

    DIM = 128
    params = init_params(kp, DIM)
    kernel_params = pack_params(params)          # int8 weights + packed slabs

    # --- small batch: fused gridless path ---
    B = 8
    x = jax.random.normal(kx, (B, 512), jnp.float32)
    out = jax.block_until_ready(drl_forward(x, kernel_params))
    ref = drl_reference(x, params)
    assert out.shape == (B, DIM)
    # int8 weights + bf16 activations; BN absorbs the quant scale exactly, the residual
    # rounding error is ~1% RMS on unit-scale outputs -> 1e-1 max-abs tolerance.
    err = float(jnp.max(jnp.abs(out - ref)))
    assert err < 1e-1, err

    # --- larger batch: batch-tiled weight-resident path (exercises padding + masking) ---
    B2 = 600
    x2 = jax.random.normal(kx2, (B2, 512), jnp.float32)
    out2 = jax.block_until_ready(
        drl_forward(x2, kernel_params, batch_tile=256, fused_max_b=256))
    ref2 = drl_reference(x2, params)
    assert out2.shape == (B2, DIM)
    err2 = float(jnp.max(jnp.abs(out2 - ref2)))
    assert err2 < 1e-1, err2

    print("KERNEL_OK")
</pallas_src>

<mosaic_0001>
module attributes {stable_mosaic.version = 11 : i64} {
  func.func @_drl_fused_kernel(%arg0: memref<512x512xi8, #tpu.memory_space<vmem>>, %arg1: memref<512x128xi8, #tpu.memory_space<vmem>>, %arg2: memref<3x512xf32, #tpu.memory_space<vmem>>, %arg3: memref<2x128xf32, #tpu.memory_space<vmem>>, %arg4: memref<8x512xf32, #tpu.memory_space<vmem>>, %arg5: memref<8x128xf32, #tpu.memory_space<vmem>>) attributes {dimension_semantics = [], scalar_prefetch = 0 : i64, scratch_operands = 0 : i64, tpu.core_type = #tpu.core_type<tc>} {
    %c0 = arith.constant 0 : index
    %c0_0 = arith.constant 0 : index
    %0 = vector.load %arg4[%c0, %c0_0] : memref<8x512xf32, #tpu.memory_space<vmem>>, vector<8x512xf32>
    %1 = arith.truncf %0 : vector<8x512xf32> to vector<8x512xbf16>
    %c0_1 = arith.constant 0 : index
    %c0_2 = arith.constant 0 : index
    %2 = vector.load %arg0[%c0_1, %c0_2] : memref<512x512xi8, #tpu.memory_space<vmem>>, vector<512x512xi8>
    %3 = arith.sitofp %2 : vector<512x512xi8> to vector<512x512xf32>
    %4 = arith.truncf %3 : vector<512x512xf32> to vector<512x512xbf16>
    %cst = arith.constant dense<0.000000e+00> : vector<8x512xf32>
    %5 = tpu.matmul %1, %4, %cst {dimension_numbers = #tpu.dot_dimension_numbers<[1], [0], [0], [1], [0, 0, 1, 1], [], []>} : vector<8x512xbf16>, vector<512x512xbf16>, vector<8x512xf32> -> vector<8x512xf32>
    %cst_3 = arith.constant dense<0.000000e+00> : vector<512xf32>
    %6 = vector.multi_reduction <add>, %5, %cst_3 [0] : vector<8x512xf32> to vector<512xf32>
    %7 = vector.shape_cast %6 : vector<512xf32> to vector<1x512xf32>
    %cst_4 = arith.constant 8.000000e+00 : f32
    %8 = vector.broadcast %cst_4 : f32 to vector<1x512xf32>
    %9 = arith.divf %7, %8 : vector<1x512xf32>
    %10 = arith.mulf %5, %5 : vector<8x512xf32>
    %cst_5 = arith.constant dense<0.000000e+00> : vector<512xf32>
    %11 = vector.multi_reduction <add>, %10, %cst_5 [0] : vector<8x512xf32> to vector<512xf32>
    %12 = vector.shape_cast %11 : vector<512xf32> to vector<1x512xf32>
    %cst_6 = arith.constant 8.000000e+00 : f32
    %13 = vector.broadcast %cst_6 : f32 to vector<1x512xf32>
    %14 = arith.divf %12, %13 : vector<1x512xf32>
    %15 = arith.mulf %9, %9 : vector<1x512xf32>
    %16 = arith.subf %14, %15 : vector<1x512xf32>
    %cst_7 = arith.constant 0.000000e+00 : f32
    %17 = vector.broadcast %cst_7 : f32 to vector<1x512xf32>
    %18 = arith.maximumf %16, %17 : vector<1x512xf32>
    %19 = vector.broadcast %9 : vector<1x512xf32> to vector<8x512xf32>
    %20 = arith.subf %5, %19 : vector<8x512xf32>
    %cst_8 = arith.constant 9.99999974E-6 : f32
    %21 = vector.broadcast %cst_8 : f32 to vector<1x512xf32>
    %22 = arith.addf %18, %21 : vector<1x512xf32>
    %23 = math.rsqrt %22 : vector<1x512xf32>
    %24 = vector.broadcast %23 : vector<1x512xf32> to vector<8x512xf32>
    %25 = arith.mulf %20, %24 : vector<8x512xf32>
    %c0_9 = arith.constant 0 : index
    %c0_10 = arith.constant 0 : index
    %26 = vector.load %arg2[%c0_9, %c0_10] : memref<3x512xf32, #tpu.memory_space<vmem>>, vector<1x512xf32>
    %27 = vector.broadcast %26 : vector<1x512xf32> to vector<8x512xf32>
    %28 = arith.mulf %25, %27 : vector<8x512xf32>
    %c1 = arith.constant 1 : index
    %c0_11 = arith.constant 0 : index
    %29 = vector.load %arg2[%c1, %c0_11] : memref<3x512xf32, #tpu.memory_space<vmem>>, vector<1x512xf32>
    %30 = vector.broadcast %29 : vector<1x512xf32> to vector<8x512xf32>
    %31 = arith.addf %28, %30 : vector<8x512xf32>
    %c2 = arith.constant 2 : index
    %c0_12 = arith.constant 0 : index
    %32 = vector.load %arg2[%c2, %c0_12] : memref<3x512xf32, #tpu.memory_space<vmem>>, vector<1x512xf32>
    %cst_13 = arith.constant 0.000000e+00 : f32
    %33 = vector.broadcast %cst_13 : f32 to vector<8x512xf32>
    %34 = arith.cmpf ogt, %31, %33 : vector<8x512xf32>
    %35 = vector.broadcast %32 : vector<1x512xf32> to vector<8x512xf32>
    %36 = arith.mulf %35, %31 : vector<8x512xf32>
    %37 = arith.select %34, %31, %36 : vector<8x512xi1>, vector<8x512xf32>
    %38 = arith.truncf %37 : vector<8x512xf32> to vector<8x512xbf16>
    %c0_14 = arith.constant 0 : index
    %c0_15 = arith.constant 0 : index
    %39 = vector.load %arg1[%c0_14, %c0_15] : memref<512x128xi8, #tpu.memory_space<vmem>>, vector<512x128xi8>
    %40 = arith.sitofp %39 : vector<512x128xi8> to vector<512x128xf32>
    %41 = arith.truncf %40 : vector<512x128xf32> to vector<512x128xbf16>
    %cst_16 = arith.constant dense<0.000000e+00> : vector<8x128xf32>
    %42 = tpu.matmul %38, %41, %cst_16 {dimension_numbers = #tpu.dot_dimension_numbers<[1], [0], [0], [1], [0, 0, 1, 1], [], []>} : vector<8x512xbf16>, vector<512x128xbf16>, vector<8x128xf32> -> vector<8x128xf32>
    %cst_17 = arith.constant dense<0.000000e+00> : vector<128xf32>
    %43 = vector.multi_reduction <add>, %42, %cst_17 [0] : vector<8x128xf32> to vector<128xf32>
    %44 = vector.shape_cast %43 : vector<128xf32> to vector<1x128xf32>
    %cst_18 = arith.constant 8.000000e+00 : f32
    %45 = vector.broadcast %cst_18 : f32 to vector<1x128xf32>
    %46 = arith.divf %44, %45 : vector<1x128xf32>
    %47 = arith.mulf %42, %42 : vector<8x128xf32>
    %cst_19 = arith.constant dense<0.000000e+00> : vector<128xf32>
    %48 = vector.multi_reduction <add>, %47, %cst_19 [0] : vector<8x128xf32> to vector<128xf32>
    %49 = vector.shape_cast %48 : vector<128xf32> to vector<1x128xf32>
    %cst_20 = arith.constant 8.000000e+00 : f32
    %50 = vector.broadcast %cst_20 : f32 to vector<1x128xf32>
    %51 = arith.divf %49, %50 : vector<1x128xf32>
    %52 = arith.mulf %46, %46 : vector<1x128xf32>
    %53 = arith.subf %51, %52 : vector<1x128xf32>
    %cst_21 = arith.constant 0.000000e+00 : f32
    %54 = vector.broadcast %cst_21 : f32 to vector<1x128xf32>
    %55 = arith.maximumf %53, %54 : vector<1x128xf32>
    %56 = vector.broadcast %46 : vector<1x128xf32> to vector<8x128xf32>
    %57 = arith.subf %42, %56 : vector<8x128xf32>
    %cst_22 = arith.constant 9.99999974E-6 : f32
    %58 = vector.broadcast %cst_22 : f32 to vector<1x128xf32>
    %59 = arith.addf %55, %58 : vector<1x128xf32>
    %60 = math.rsqrt %59 : vector<1x128xf32>
    %61 = vector.broadcast %60 : vector<1x128xf32> to vector<8x128xf32>
    %62 = arith.mulf %57, %61 : vector<8x128xf32>
    %c0_23 = arith.constant 0 : index
    %c0_24 = arith.constant 0 : index
    %63 = vector.load %arg3[%c0_23, %c0_24] : memref<2x128xf32, #tpu.memory_space<vmem>>, vector<1x128xf32>
    %64 = vector.broadcast %63 : vector<1x128xf32> to vector<8x128xf32>
    %65 = arith.mulf %62, %64 : vector<8x128xf32>
    %c1_25 = arith.constant 1 : index
    %c0_26 = arith.constant 0 : index
    %66 = vector.load %arg3[%c1_25, %c0_26] : memref<2x128xf32, #tpu.memory_space<vmem>>, vector<1x128xf32>
    %67 = vector.broadcast %66 : vector<1x128xf32> to vector<8x128xf32>
    %68 = arith.addf %65, %67 : vector<8x128xf32>
    %c0_27 = arith.constant 0 : index
    %c0_28 = arith.constant 0 : index
    %69 = vector.load %arg5[%c0_27, %c0_28] : memref<8x128xf32, #tpu.memory_space<vmem>>, vector<8x128xf32>
    tpu.vector_store %arg5[%c0_27, %c0_28], %68 {strides = array<i32>} : memref<8x128xf32, #tpu.memory_space<vmem>>, vector<8x128xf32>,
    return
  }
}

</mosaic_0001>

<llo_original>
// kernel: tpu_custom_call.1
$region0: #{tpu_custom_call.1}
  #allocation0 [shape = 'u32[]', space=smem, size = 0x4, offset = 0x4, fixed_abs, tag = 'smem constant byte address 0x4 - core index']
  #allocation1 [shape = 'u32[144,128]{1,0:T(1,128)}', space=vmem, size = 0x12000, scoped, tag = 'internal scratch']
  %s0 = inlined_call_operand.hbm [shape: s8[512,512], index: 0, kind: input, shape index: {}]
  %s1 = inlined_call_operand.hbm [shape: s8[512,128], index: 1, kind: input, shape index: {}]
  %s2 = inlined_call_operand.hbm [shape: f32[3,512], index: 2, kind: input, shape index: {}]
  %s3 = inlined_call_operand.vmem [shape: f32[2,128], index: 3, kind: input, shape index: {}]
  %s4 = inlined_call_operand.hbm [shape: f32[8,512], index: 4, kind: input, shape index: {}]
  %s5 = inlined_call_operand.hbm [shape: f32[8,128], index: 5, kind: output, shape index: {}]
  %s6 = sld [smem:[#allocation0]]
  $region46: #{tpu_custom_call.1} parent=0
    _
  %s8 = ssub.s32 1, %s6
  %s9 = scalar_select 0, %s8, %s6
  $region1: #{tpu_custom_call.1} parent=0
    #allocation2 [shape = 'u8[262144]{0}', space=vmem, size = 0x40000, scoped, tag = 'input window, operand 0, single buffered']
    #allocation3 [shape = 's32[1]{0}', space=sflag, size = 0x4, scoped, tag = 'scoped memory for tpu_custom_call.1']
    #allocation4 [shape = 's32[1]{0}', space=sflag, size = 0x4, scoped, tag = 'scoped memory for tpu_custom_call.1']
    #allocation5 [shape = 'u8[65536]{0}', space=vmem, size = 0x10000, scoped, tag = 'input window, operand 1, single buffered']
    #allocation6 [shape = 's32[1]{0}', space=sflag, size = 0x4, scoped, tag = 'scoped memory for tpu_custom_call.1']
    #allocation7 [shape = 'u8[8192]{0}', space=vmem, size = 0x2000, scoped, tag = 'input window, operand 2, single buffered']
    #allocation8 [shape = 'u8[16384]{0}', space=vmem, size = 0x4000, scoped, tag = 'input window, operand 4, single buffered']
    #allocation9 [shape = 's32[1]{0}', space=sflag, size = 0x4, scoped, tag = 'scoped memory for tpu_custom_call.1']
    #allocation10 [shape = 'u8[4096]{0}', space=vmem, size = 0x1000, scoped, tag = 'output window, operand 0, single buffered']
    %10 = vsyncpa [#allocation3], 0
    %11 = vsyncpa [#allocation6], 0
    %12 = vsyncpa [#allocation9], 0
    %13 = vsyncpa [#allocation4], 0
    // Predicated region
    $region2: #{tpu_custom_call.1} parent=1 // pred_check
      _
    $region3: #{tpu_custom_call.1} parent=1 // pred_check_branch
      %15 = sbr.rel (0) target = $region5
    $region4: #{tpu_custom_call.1} parent=1 // pred_region
      %s17 = ssub.s32 8192, 8192
      %18 = vsyncadd [#allocation3], %s17
      %s19 = sshll.u32 [#allocation2], 4
      %s20 = int_to_ptr.vmem [resolvable:$true] %s19
      %25 = dma.hbm_to_vmem [thread:$0]  %s0, 8192, %s20, [#allocation3], 512, 512, 32
    $region5: #{tpu_custom_call.1} parent=1 // pred_fallthru
      _
    // Predicated region
    $region6: #{tpu_custom_call.1} parent=1 // pred_check
      _
    $region7: #{tpu_custom_call.1} parent=1 // pred_check_branch
      %27 = sbr.rel (0) target = $region9
    $region8: #{tpu_custom_call.1} parent=1 // pred_region
      %s29 = ssub.s32 2048, 2048
      %30 = vsyncadd [#allocation6], %s29
      %s31 = sshll.u32 [#allocation5], 4
      %s32 = int_to_ptr.vmem [resolvable:$true] %s31
      %37 = dma.hbm_to_vmem [thread:$0]  %s1, 2048, %s32, [#allocation6], 128, 128, 8
    $region9: #{tpu_custom_call.1} parent=1 // pred_fallthru
      _
    // Predicated region
    $region10: #{tpu_custom_call.1} parent=1 // pred_check
      _
    $region11: #{tpu_custom_call.1} parent=1 // pred_check_branch
      %39 = sbr.rel (0) target = $region13
    $region12: #{tpu_custom_call.1} parent=1 // pred_region
      %s41 = ssub.s32 256, 256
      %42 = vsyncadd [#allocation6], %s41
      %s44 = sshll.u32 [#allocation7], 4
      %s45 = int_to_ptr.vmem [resolvable:$true] %s44
      %47 = dma.hbm_to_vmem [thread:$0]  %s2, 256, %s45, [#allocation6]
    $region13: #{tpu_custom_call.1} parent=1 // pred_fallthru
      _
    // Predicated region
    $region14: #{tpu_custom_call.1} parent=1 // pred_check
      _
    $region15: #{tpu_custom_call.1} parent=1 // pred_check_branch
      %49 = sbr.rel (0) target = $region17
    $region16: #{tpu_custom_call.1} parent=1 // pred_region
      _
    $region17: #{tpu_custom_call.1} parent=1 // pred_fallthru
      _
    // Predicated region
    $region18: #{tpu_custom_call.1} parent=1 // pred_check
      _
    $region19: #{tpu_custom_call.1} parent=1 // pred_check_branch
      %51 = sbr.rel (0) target = $region21
    $region20: #{tpu_custom_call.1} parent=1 // pred_region
      %s53 = ssub.s32 512, 512
      %54 = vsyncadd [#allocation9], %s53
      %s56 = sshll.u32 [#allocation8], 4
      %s57 = int_to_ptr.vmem [resolvable:$true] %s56
      %59 = dma.hbm_to_vmem [thread:$0]  %s4, 512, %s57, [#allocation9]
    $region21: #{tpu_custom_call.1} parent=1 // pred_fallthru
      _
    // Predicated region
    $region22: #{tpu_custom_call.1} parent=1 // pred_check
      _
    $region23: #{tpu_custom_call.1} parent=1 // pred_check_branch
      %61 = sbr.rel (0) target = $region25
    $region24: #{tpu_custom_call.1} parent=1 // pred_region
      %62 = dma.done [#allocation3], 8192
    $region25: #{tpu_custom_call.1} parent=1 // pred_fallthru
      _
    // Predicated region
    $region26: #{tpu_custom_call.1} parent=1 // pred_check
      _
    $region27: #{tpu_custom_call.1} parent=1 // pred_check_branch
      %64 = sbr.rel (0) target = $region29
    $region28: #{tpu_custom_call.1} parent=1 // pred_region
      %65 = dma.done [#allocation6], 2048
    $region29: #{tpu_custom_call.1} parent=1 // pred_fallthru
      _
    // Predicated region
    $region30: #{tpu_custom_call.1} parent=1 // pred_check
      _
    $region31: #{tpu_custom_call.1} parent=1 // pred_check_branch
      %67 = sbr.rel (0) target = $region33
    $region32: #{tpu_custom_call.1} parent=1 // pred_region
      %68 = dma.done [#allocation6], 256
    $region33: #{tpu_custom_call.1} parent=1 // pred_fallthru
      _
    // Predicated region
    $region34: #{tpu_custom_call.1} parent=1 // pred_check
      _
    $region35: #{tpu_custom_call.1} parent=1 // pred_check_branch
      %70 = sbr.rel (0) target = $region37
    $region36: #{tpu_custom_call.1} parent=1 // pred_region
      %71 = dma.done [#allocation9], 512
    $region37: #{tpu_custom_call.1} parent=1 // pred_fallthru
      _
    %v73 = vld [vmem:[#allocation8] sm:$0xff]
    %v74 = vld [vmem:[#allocation8 + $0x8] sm:$0xff]
    %v75 = vld [vmem:[#allocation8 + $0x10] sm:$0xff]
    %v76 = vld [vmem:[#allocation8 + $0x18] sm:$0xff]
    %v77 = vpack.c.bf16 %v73, %v73
    %v78 = vpack.c.bf16 %v74, %v74
    %v79 = vpack.c.bf16 %v75, %v75
    %v80 = vpack.c.bf16 %v76, %v76
    %v81 = vld [vmem:[#allocation2] sm:$0xff]
    %v82 = vld [vmem:[#allocation2 + $0x8] sm:$0xff]
    %v83 = vld [vmem:[#allocation2 + $0x10] sm:$0xff]
    %v84 = vld [vmem:[#allocation2 + $0x18] sm:$0xff]
    %v85 = vld [vmem:[#allocation2 + $0x20] sm:$0xff]
    %v86 = vld [vmem:[#allocation2 + $0x28] sm:$0xff]
    %v87 = vld [vmem:[#allocation2 + $0x30] sm:$0xff]
    %v88 = vld [vmem:[#allocation2 + $0x38] sm:$0xff]
    %v89 = vld [vmem:[#allocation2 + $0x40] sm:$0xff]
    %v90 = vld [vmem:[#allocation2 + $0x48] sm:$0xff]
    %v91 = vld [vmem:[#allocation2 + $0x50] sm:$0xff]
    %v92 = vld [vmem:[#allocation2 + $0x58] sm:$0xff]
    %v93 = vld [vmem:[#allocation2 + $0x60] sm:$0xff]
    %v94 = vld [vmem:[#allocation2 + $0x68] sm:$0xff]
    %v95 = vld [vmem:[#allocation2 + $0x70] sm:$0xff]
    %v96 = vld [vmem:[#allocation2 + $0x78] sm:$0xff]
    %v97 = vld [vmem:[#allocation2 + $0x80] sm:$0xff]
    %v98 = vld [vmem:[#allocation2 + $0x88] sm:$0xff]
    %v99 = vld [vmem:[#allocation2 + $0x90] sm:$0xff]
    %v100 = vld [vmem:[#allocation2 + $0x98] sm:$0xff]
    %v101 = vld [vmem:[#allocation2 + $0xa0] sm:$0xff]
    %v102 = vld [vmem:[#allocation2 + $0xa8] sm:$0xff]
    %v103 = vld [vmem:[#allocation2 + $0xb0] sm:$0xff]
    %v104 = vld [vmem:[#allocation2 + $0xb8] sm:$0xff]
    %v105 = vld [vmem:[#allocation2 + $0xc0] sm:$0xff]
    %v106 = vld [vmem:[#allocation2 + $0xc8] sm:$0xff]
    %v107 = vld [vmem:[#allocation2 + $0xd0] sm:$0xff]
    %v108 = vld [vmem:[#allocation2 + $0xd8] sm:$0xff]
    %v109 = vld [vmem:[#allocation2 + $0xe0] sm:$0xff]
    %v110 = vld [vmem:[#allocation2 + $0xe8] sm:$0xff]
    %v111 = vld [vmem:[#allocation2 + $0xf0] sm:$0xff]
    %v112 = vld [vmem:[#allocation2 + $0xf8] sm:$0xff]
    %v113 = vld [vmem:[#allocation2 + $0x100] sm:$0xff]
    %v114 = vld [vmem:[#allocation2 + $0x108] sm:$0xff]
    %v115 = vld [vmem:[#allocation2 + $0x110] sm:$0xff]
    %v116 = vld [vmem:[#allocation2 + $0x118] sm:$0xff]
    %v117 = vld [vmem:[#allocation2 + $0x120] sm:$0xff]
    %v118 = vld [vmem:[#allocation2 + $0x128] sm:$0xff]
    %v119 = vld [vmem:[#allocation2 + $0x130] sm:$0xff]
    %v120 = vld [vmem:[#allocation2 + $0x138] sm:$0xff]
    %v121 = vld [vmem:[#allocation2 + $0x140] sm:$0xff]
    %v122 = vld [vmem:[#allocation2 + $0x148] sm:$0xff]
    %v123 = vld [vmem:[#allocation2 + $0x150] sm:$0xff]
    %v124 = vld [vmem:[#allocation2 + $0x158] sm:$0xff]
    %v125 = vld [vmem:[#allocation2 + $0x160] sm:$0xff]
    %v126 = vld [vmem:[#allocation2 + $0x168] sm:$0xff]
    %v127 = vld [vmem:[#allocation2 + $0x170] sm:$0xff]
    %v128 = vld [vmem:[#allocation2 + $0x178] sm:$0xff]
    %v129 = vld [vmem:[#allocation2 + $0x180] sm:$0xff]
    %v130 = vld [vmem:[#allocation2 + $0x188] sm:$0xff]
    %v131 = vld [vmem:[#allocation2 + $0x190] sm:$0xff]
    %v132 = vld [vmem:[#allocation2 + $0x198] sm:$0xff]
    %v133 = vld [vmem:[#allocation2 + $0x1a0] sm:$0xff]
    %v134 = vld [vmem:[#allocation2 + $0x1a8] sm:$0xff]
    %v135 = vld [vmem:[#allocation2 + $0x1b0] sm:$0xff]
    %v136 = vld [vmem:[#allocation2 + $0x1b8] sm:$0xff]
    %v137 = vld [vmem:[#allocation2 + $0x1c0] sm:$0xff]
    %v138 = vld [vmem:[#allocation2 + $0x1c8] sm:$0xff]
    %v139 = vld [vmem:[#allocation2 + $0x1d0] sm:$0xff]
    %v140 = vld [vmem:[#allocation2 + $0x1d8] sm:$0xff]
    %v141 = vld [vmem:[#allocation2 + $0x1e0] sm:$0xff]
    %v142 = vld [vmem:[#allocation2 + $0x1e8] sm:$0xff]
    %v143 = vld [vmem:[#allocation2 + $0x1f0] sm:$0xff]
    %v144 = vld [vmem:[#allocation2 + $0x1f8] sm:$0xff]
    %v145 = vunpack.c.l.s8.bf16 %v81
    %v146 = vunpack.c.l.s8.bf16 %v82
    %v147 = vunpack.c.l.s8.bf16 %v83
    %v148 = vunpack.c.l.s8.bf16 %v84
    %v149 = vunpack.c.h.s8.bf16 %v81
    %v150 = vunpack.c.h.s8.bf16 %v82
    %v151 = vunpack.c.h.s8.bf16 %v83
    %v152 = vunpack.c.h.s8.bf16 %v84
    %v153 = vunpack.c.l.s8.bf16 %v85
    %v154 = vunpack.c.l.s8.bf16 %v86
    %v155 = vunpack.c.l.s8.bf16 %v87
    %v156 = vunpack.c.l.s8.bf16 %v88
    %v157 = vunpack.c.h.s8.bf16 %v85
    %v158 = vunpack.c.h.s8.bf16 %v86
    %v159 = vunpack.c.h.s8.bf16 %v87
    %v160 = vunpack.c.h.s8.bf16 %v88
    %v161 = vunpack.c.l.s8.bf16 %v89
    %v162 = vunpack.c.l.s8.bf16 %v90
    %v163 = vunpack.c.l.s8.bf16 %v91
    %v164 = vunpack.c.l.s8.bf16 %v92
    %v165 = vunpack.c.h.s8.bf16 %v89
    %v166 = vunpack.c.h.s8.bf16 %v90
    %v167 = vunpack.c.h.s8.bf16 %v91
    %v168 = vunpack.c.h.s8.bf16 %v92
    %v169 = vunpack.c.l.s8.bf16 %v93
    %v170 = vunpack.c.l.s8.bf16 %v94
    %v171 = vunpack.c.l.s8.bf16 %v95
    %v172 = vunpack.c.l.s8.bf16 %v96
    %v173 = vunpack.c.h.s8.bf16 %v93
    %v174 = vunpack.c.h.s8.bf16 %v94
    %v175 = vunpack.c.h.s8.bf16 %v95
    %v176 = vunpack.c.h.s8.bf16 %v96
    %v177 = vunpack.c.l.s8.bf16 %v97
    %v178 = vunpack.c.l.s8.bf16 %v98
    %v179 = vunpack.c.l.s8.bf16 %v99
    %v180 = vunpack.c.l.s8.bf16 %v100
    %v181 = vunpack.c.h.s8.bf16 %v97
    %v182 = vunpack.c.h.s8.bf16 %v98
    %v183 = vunpack.c.h.s8.bf16 %v99
    %v184 = vunpack.c.h.s8.bf16 %v100
    %v185 = vunpack.c.l.s8.bf16 %v101
    %v186 = vunpack.c.l.s8.bf16 %v102
    %v187 = vunpack.c.l.s8.bf16 %v103
    %v188 = vunpack.c.l.s8.bf16 %v104
    %v189 = vunpack.c.h.s8.bf16 %v101
    %v190 = vunpack.c.h.s8.bf16 %v102
    %v191 = vunpack.c.h.s8.bf16 %v103
    %v192 = vunpack.c.h.s8.bf16 %v104
    %v193 = vunpack.c.l.s8.bf16 %v105
    %v194 = vunpack.c.l.s8.bf16 %v106
    %v195 = vunpack.c.l.s8.bf16 %v107
    %v196 = vunpack.c.l.s8.bf16 %v108
    %v197 = vunpack.c.h.s8.bf16 %v105
    %v198 = vunpack.c.h.s8.bf16 %v106
    %v199 = vunpack.c.h.s8.bf16 %v107
    %v200 = vunpack.c.h.s8.bf16 %v108
    %v201 = vunpack.c.l.s8.bf16 %v109
    %v202 = vunpack.c.l.s8.bf16 %v110
    %v203 = vunpack.c.l.s8.bf16 %v111
    %v204 = vunpack.c.l.s8.bf16 %v112
    %v205 = vunpack.c.h.s8.bf16 %v109
    %v206 = vunpack.c.h.s8.bf16 %v110
    %v207 = vunpack.c.h.s8.bf16 %v111
    %v208 = vunpack.c.h.s8.bf16 %v112
    %v209 = vunpack.c.l.s8.bf16 %v113
    %v210 = vunpack.c.l.s8.bf16 %v114
    %v211 = vunpack.c.l.s8.bf16 %v115
    %v212 = vunpack.c.l.s8.bf16 %v116
    %v213 = vunpack.c.h.s8.bf16 %v113
    %v214 = vunpack.c.h.s8.bf16 %v114
    %v215 = vunpack.c.h.s8.bf16 %v115
    %v216 = vunpack.c.h.s8.bf16 %v116
    %v217 = vunpack.c.l.s8.bf16 %v117
    %v218 = vunpack.c.l.s8.bf16 %v118
    %v219 = vunpack.c.l.s8.bf16 %v119
    %v220 = vunpack.c.l.s8.bf16 %v120
    %v221 = vunpack.c.h.s8.bf16 %v117
    %v222 = vunpack.c.h.s8.bf16 %v118
    %v223 = vunpack.c.h.s8.bf16 %v119
    %v224 = vunpack.c.h.s8.bf16 %v120
    %v225 = vunpack.c.l.s8.bf16 %v121
    %v226 = vunpack.c.l.s8.bf16 %v122
    %v227 = vunpack.c.l.s8.bf16 %v123
    %v228 = vunpack.c.l.s8.bf16 %v124
    %v229 = vunpack.c.h.s8.bf16 %v121
    %v230 = vunpack.c.h.s8.bf16 %v122
    %v231 = vunpack.c.h.s8.bf16 %v123
    %v232 = vunpack.c.h.s8.bf16 %v124
    %v233 = vunpack.c.l.s8.bf16 %v125
    %v234 = vunpack.c.l.s8.bf16 %v126
    %v235 = vunpack.c.l.s8.bf16 %v127
    %v236 = vunpack.c.l.s8.bf16 %v128
    %v237 = vunpack.c.h.s8.bf16 %v125
    %v238 = vunpack.c.h.s8.bf16 %v126
    %v239 = vunpack.c.h.s8.bf16 %v127
    %v240 = vunpack.c.h.s8.bf16 %v128
    %v241 = vunpack.c.l.s8.bf16 %v129
    %v242 = vunpack.c.l.s8.bf16 %v130
    %v243 = vunpack.c.l.s8.bf16 %v131
    %v244 = vunpack.c.l.s8.bf16 %v132
    %v245 = vunpack.c.h.s8.bf16 %v129
    %v246 = vunpack.c.h.s8.bf16 %v130
    %v247 = vunpack.c.h.s8.bf16 %v131
    %v248 = vunpack.c.h.s8.bf16 %v132
    %v249 = vunpack.c.l.s8.bf16 %v133
    %v250 = vunpack.c.l.s8.bf16 %v134
    %v251 = vunpack.c.l.s8.bf16 %v135
    %v252 = vunpack.c.l.s8.bf16 %v136
    %v253 = vunpack.c.h.s8.bf16 %v133
    %v254 = vunpack.c.h.s8.bf16 %v134
    %v255 = vunpack.c.h.s8.bf16 %v135
    %v256 = vunpack.c.h.s8.bf16 %v136
    %v257 = vunpack.c.l.s8.bf16 %v137
    %v258 = vunpack.c.l.s8.bf16 %v138
    %v259 = vunpack.c.l.s8.bf16 %v139
    %v260 = vunpack.c.l.s8.bf16 %v140
    %v261 = vunpack.c.h.s8.bf16 %v137
    %v262 = vunpack.c.h.s8.bf16 %v138
    %v263 = vunpack.c.h.s8.bf16 %v139
    %v264 = vunpack.c.h.s8.bf16 %v140
    %v265 = vunpack.c.l.s8.bf16 %v141
    %v266 = vunpack.c.l.s8.bf16 %v142
    %v267 = vunpack.c.l.s8.bf16 %v143
    %v268 = vunpack.c.l.s8.bf16 %v144
    %v269 = vunpack.c.h.s8.bf16 %v141
    %v270 = vunpack.c.h.s8.bf16 %v142
    %v271 = vunpack.c.h.s8.bf16 %v143
    %v272 = vunpack.c.h.s8.bf16 %v144
    %273 = vmatprep.subr.bf16.mxu0 %v146
    %274 = vmatpush1.bf16.msra.mxu0 %v145
    %275 = vmatprep.subr.bf16.mxu0 %v150
    %276 = vmatpush1.bf16.msra.mxu0 %v149
    %277 = vmatprep.subr.bf16.mxu0 %v154
    %278 = vmatpush1.bf16.msra.mxu0 %v153
    %279 = vmatprep.subr.bf16.mxu0 %v158
    %280 = vmatpush1.bf16.msra.mxu0 %v157
    %281 = vmatprep.subr.bf16.mxu0 %v162
    %282 = vmatpush1.bf16.msra.mxu0 %v161
    %283 = vmatprep.subr.bf16.mxu0 %v166
    %284 = vmatpush1.bf16.msra.mxu0 %v165
    %285 = vmatprep.subr.bf16.mxu0 %v170
    %286 = vmatpush1.bf16.msra.mxu0 %v169
    %287 = vmatprep.subr.bf16.mxu0 %v174
    %288 = vmatpush1.bf16.msra.mxu0 %v173
    %289 = vmatprep.subr.bf16.mxu0 %v178
    %290 = vmatpush1.bf16.msra.mxu0 %v177
    %291 = vmatprep.subr.bf16.mxu0 %v182
    %292 = vmatpush1.bf16.msra.mxu0 %v181
    %293 = vmatprep.subr.bf16.mxu0 %v186
    %294 = vmatpush1.bf16.msra.mxu0 %v185
    %295 = vmatprep.subr.bf16.mxu0 %v190
    %296 = vmatpush1.bf16.msra.mxu0 %v189
    %297 = vmatprep.subr.bf16.mxu0 %v194
    %298 = vmatpush1.bf16.msra.mxu0 %v193
    %299 = vmatprep.subr.bf16.mxu0 %v198
    %300 = vmatpush1.bf16.msra.mxu0 %v197
    %301 = vmatprep.subr.bf16.mxu0 %v202
    %302 = vmatpush1.bf16.msra.mxu0 %v201
    %303 = vmatprep.subr.bf16.mxu0 %v206
    %304 = vmatpush1.bf16.msra.mxu0 %v205
    %305 = vmatprep.mubr.bf16.mxu0 %v78
    %306 = vmatmul.mubr.bf16.gmra.mrb[0].mxu0 %v77
    %v307 = vpop.f32.mrb[0].mxu0
    %v308 = vadd.f32 0.0, %v307
    %v309 = vpop.f32.mrb[0].mxu0
    %v310 = vadd.f32 0.0, %v309
    %v311 = vpop.f32.mrb[0].mxu0
    %v312 = vpop.f32.mrb[0].mxu0
    %313 = vdwg.mxu0
    %314 = vmatprep.subr.bf16.mxu0 %v210
    %315 = vmatpush1.bf16.msra.mxu0 %v209
    %316 = vmatprep.subr.bf16.mxu0 %v214
    %317 = vmatpush1.bf16.msra.mxu0 %v213
    %318 = vmatprep.subr.bf16.mxu0 %v218
    %319 = vmatpush1.bf16.msra.mxu0 %v217
    %320 = vmatprep.subr.bf16.mxu0 %v222
    %321 = vmatpush1.bf16.msra.mxu0 %v221
    %322 = vmatprep.subr.bf16.mxu0 %v226
    %323 = vmatpush1.bf16.msra.mxu0 %v225
    %324 = vmatprep.subr.bf16.mxu0 %v230
    %325 = vmatpush1.bf16.msra.mxu0 %v229
    %326 = vmatprep.subr.bf16.mxu0 %v234
    %327 = vmatpush1.bf16.msra.mxu0 %v233
    %328 = vmatprep.subr.bf16.mxu0 %v238
    %329 = vmatpush1.bf16.msra.mxu0 %v237
    %330 = vmatprep.subr.bf16.mxu0 %v242
    %331 = vmatpush1.bf16.msra.mxu0 %v241
    %332 = vmatprep.subr.bf16.mxu0 %v246
    %333 = vmatpush1.bf16.msra.mxu0 %v245
    %334 = vmatprep.subr.bf16.mxu0 %v250
    %335 = vmatpush1.bf16.msra.mxu0 %v249
    %336 = vmatprep.subr.bf16.mxu0 %v254
    %337 = vmatpush1.bf16.msra.mxu0 %v253
    %338 = vmatprep.subr.bf16.mxu0 %v258
    %339 = vmatpush1.bf16.msra.mxu0 %v257
    %340 = vmatprep.subr.bf16.mxu0 %v262
    %341 = vmatpush1.bf16.msra.mxu0 %v261
    %342 = vmatprep.subr.bf16.mxu0 %v266
    %343 = vmatpush1.bf16.msra.mxu0 %v265
    %344 = vmatprep.subr.bf16.mxu0 %v270
    %345 = vmatpush1.bf16.msra.mxu0 %v269
    %346 = vmatprep.mubr.bf16.mxu0 %v80
    %347 = vmatmul.mubr.bf16.gmra.mrb[0].mxu0 %v79
    %v348 = vpop.f32.mrb[0].mxu0
    %v349 = vadd.f32 %v308, %v348
    %v350 = vpop.f32.mrb[0].mxu0
    %v351 = vadd.f32 %v310, %v350
    %v352 = vpop.f32.mrb[0].mxu0
    %v353 = vpop.f32.mrb[0].mxu0
    %354 = vdwg.mxu0
    %355 = vmatprep.subr.bf16.mxu0 %v148
    %356 = vmatpush1.bf16.msra.mxu0 %v147
    %357 = vmatprep.subr.bf16.mxu0 %v152
    %358 = vmatpush1.bf16.msra.mxu0 %v151
    %359 = vmatprep.subr.bf16.mxu0 %v156
    %360 = vmatpush1.bf16.msra.mxu0 %v155
    %361 = vmatprep.subr.bf16.mxu0 %v160
    %362 = vmatpush1.bf16.msra.mxu0 %v159
    %363 = vmatprep.subr.bf16.mxu0 %v164
    %364 = vmatpush1.bf16.msra.mxu0 %v163
    %365 = vmatprep.subr.bf16.mxu0 %v168
    %366 = vmatpush1.bf16.msra.mxu0 %v167
    %367 = vmatprep.subr.bf16.mxu0 %v172
    %368 = vmatpush1.bf16.msra.mxu0 %v171
    %369 = vmatprep.subr.bf16.mxu0 %v176
    %370 = vmatpush1.bf16.msra.mxu0 %v175
    %371 = vmatprep.subr.bf16.mxu0 %v180
    %372 = vmatpush1.bf16.msra.mxu0 %v179
    %373 = vmatprep.subr.bf16.mxu0 %v184
    %374 = vmatpush1.bf16.msra.mxu0 %v183
    %375 = vmatprep.subr.bf16.mxu0 %v188
    %376 = vmatpush1.bf16.msra.mxu0 %v187
    %377 = vmatprep.subr.bf16.mxu0 %v192
    %378 = vmatpush1.bf16.msra.mxu0 %v191
    %379 = vmatprep.subr.bf16.mxu0 %v196
    %380 = vmatpush1.bf16.msra.mxu0 %v195
    %381 = vmatprep.subr.bf16.mxu0 %v200
    %382 = vmatpush1.bf16.msra.mxu0 %v199
    %383 = vmatprep.subr.bf16.mxu0 %v204
    %384 = vmatpush1.bf16.msra.mxu0 %v203
    %385 = vmatprep.subr.bf16.mxu0 %v208
    %386 = vmatpush1.bf16.msra.mxu0 %v207
    %387 = vmatprep.mubr.bf16.mxu0 %v78
    %388 = vmatmul.mubr.bf16.gmra.mrb[0].mxu0 %v77
    %v389 = vpop.f32.mrb[0].mxu0
    %v390 = vadd.f32 0.0, %v389
    %v391 = vpop.f32.mrb[0].mxu0
    %v392 = vadd.f32 0.0, %v391
    %v393 = vpop.f32.mrb[0].mxu0
    %v394 = vpop.f32.mrb[0].mxu0
    %395 = vdwg.mxu0
    %396 = vmatprep.subr.bf16.mxu0 %v212
    %397 = vmatpush1.bf16.msra.mxu0 %v211
    %398 = vmatprep.subr.bf16.mxu0 %v216
    %399 = vmatpush1.bf16.msra.mxu0 %v215
    %400 = vmatprep.subr.bf16.mxu0 %v220
    %401 = vmatpush1.bf16.msra.mxu0 %v219
    %402 = vmatprep.subr.bf16.mxu0 %v224
    %403 = vmatpush1.bf16.msra.mxu0 %v223
    %404 = vmatprep.subr.bf16.mxu0 %v228
    %405 = vmatpush1.bf16.msra.mxu0 %v227
    %406 = vmatprep.subr.bf16.mxu0 %v232
    %407 = vmatpush1.bf16.msra.mxu0 %v231
    %408 = vmatprep.subr.bf16.mxu0 %v236
    %409 = vmatpush1.bf16.msra.mxu0 %v235
    %410 = vmatprep.subr.bf16.mxu0 %v240
    %411 = vmatpush1.bf16.msra.mxu0 %v239
    %412 = vmatprep.subr.bf16.mxu0 %v244
    %413 = vmatpush1.bf16.msra.mxu0 %v243
    %414 = vmatprep.subr.bf16.mxu0 %v248
    %415 = vmatpush1.bf16.msra.mxu0 %v247
    %416 = vmatprep.subr.bf16.mxu0 %v252
    %417 = vmatpush1.bf16.msra.mxu0 %v251
    %418 = vmatprep.subr.bf16.mxu0 %v256
    %419 = vmatpush1.bf16.msra.mxu0 %v255
    %420 = vmatprep.subr.bf16.mxu0 %v260
    %421 = vmatpush1.bf16.msra.mxu0 %v259
    %422 = vmatprep.subr.bf16.mxu0 %v264
    %423 = vmatpush1.bf16.msra.mxu0 %v263
    %424 = vmatprep.subr.bf16.mxu0 %v268
    %425 = vmatpush1.bf16.msra.mxu0 %v267
    %426 = vmatprep.subr.bf16.mxu0 %v272
    %427 = vmatpush1.bf16.msra.mxu0 %v271
    %428 = vmatprep.mubr.bf16.mxu0 %v80
    %429 = vmatmul.mubr.bf16.gmra.mrb[0].mxu0 %v79
    %v430 = vpop.f32.mrb[0].mxu0
    %v431 = vadd.f32 %v390, %v430
    %v432 = vpop.f32.mrb[0].mxu0
    %v433 = vadd.f32 %v392, %v432
    %v434 = vpop.f32.mrb[0].mxu0
    %v435 = vpop.f32.mrb[0].mxu0
    %436 = vdwg.mxu0
    %v437 = vrot.slane %v349, 4
    %v438 = vadd.f32 %v349, %v437
    %v439 = vrot.slane %v438, 2
    %v440 = vadd.f32 %v438, %v439
    %v441 = vrot.slane %v440, 1
    %v442 = vadd.f32 %v440, %v441
    %v443 = vrot.slane %v351, 4
    %v444 = vadd.f32 %v351, %v443
    %v445 = vrot.slane %v444, 2
    %v446 = vadd.f32 %v444, %v445
    %v447 = vrot.slane %v446, 1
    %v448 = vadd.f32 %v446, %v447
    %v449 = vrot.slane %v431, 4
    %v450 = vadd.f32 %v431, %v449
    %v451 = vrot.slane %v450, 2
    %v452 = vadd.f32 %v450, %v451
    %v453 = vrot.slane %v452, 1
    %v454 = vadd.f32 %v452, %v453
    %v455 = vrot.slane %v433, 4
    %v456 = vadd.f32 %v433, %v455
    %v457 = vrot.slane %v456, 2
    %v458 = vadd.f32 %v456, %v457
    %v459 = vrot.slane %v458, 1
    %v460 = vadd.f32 %v458, %v459
    %v461 = vrcp.pop 8.0
    %v462 = vmul.f32 %v442, %v461
    %v463 = vmul.f32 %v448, %v461
    %v464 = vmul.f32 %v454, %v461
    %v465 = vmul.f32 %v460, %v461
    %v466 = vmul.f32 %v349, %v349
    %v467 = vmul.f32 %v351, %v351
    %v468 = vmul.f32 %v431, %v431
    %v469 = vmul.f32 %v433, %v433
    %v470 = vrot.slane %v466, 4
    %v471 = vadd.f32 %v466, %v470
    %v472 = vrot.slane %v471, 2
    %v473 = vadd.f32 %v471, %v472
    %v474 = vrot.slane %v473, 1
    %v475 = vadd.f32 %v473, %v474
    %v476 = vrot.slane %v467, 4
    %v477 = vadd.f32 %v467, %v476
    %v478 = vrot.slane %v477, 2
    %v479 = vadd.f32 %v477, %v478
    %v480 = vrot.slane %v479, 1
    %v481 = vadd.f32 %v479, %v480
    %v482 = vrot.slane %v468, 4
    %v483 = vadd.f32 %v468, %v482
    %v484 = vrot.slane %v483, 2
    %v485 = vadd.f32 %v483, %v484
    %v486 = vrot.slane %v485, 1
    %v487 = vadd.f32 %v485, %v486
    %v488 = vrot.slane %v469, 4
    %v489 = vadd.f32 %v469, %v488
    %v490 = vrot.slane %v489, 2
    %v491 = vadd.f32 %v489, %v490
    %v492 = vrot.slane %v491, 1
    %v493 = vadd.f32 %v491, %v492
    %v494 = vmul.f32 %v475, %v461
    %v495 = vmul.f32 %v481, %v461
    %v496 = vmul.f32 %v487, %v461
    %v497 = vmul.f32 %v493, %v461
    %v498 = vmul.f32 %v462, %v462
    %v499 = vmul.f32 %v463, %v463
    %v500 = vmul.f32 %v464, %v464
    %v501 = vmul.f32 %v465, %v465
    %v502 = vsub.f32 %v494, %v498
    %v503 = vsub.f32 %v495, %v499
    %v504 = vsub.f32 %v496, %v500
    %v505 = vsub.f32 %v497, %v501
    %v506 = vmax.f32 %v502, 0.0
    %v507 = vmax.f32 %v503, 0.0
    %v508 = vmax.f32 %v504, 0.0
    %v509 = vmax.f32 %v505, 0.0
    %v510 = vsub.f32 %v349, %v462
    %v511 = vsub.f32 %v351, %v463
    %v512 = vsub.f32 %v431, %v464
    %v513 = vsub.f32 %v433, %v465
    %v514 = vadd.f32 %v506, 1e-05
    %v515 = vadd.f32 %v507, 1e-05
    %v516 = vadd.f32 %v508, 1e-05
    %v517 = vadd.f32 %v509, 1e-05
    %v518 = vrsqrt.pop %v514
    %v519 = vrsqrt.pop %v515
    %v520 = vrsqrt.pop %v516
    %v521 = vrsqrt.pop %v517
    %v522 = vmul.f32 %v510, %v518
    %v523 = vmul.f32 %v511, %v519
    %v524 = vmul.f32 %v512, %v520
    %v525 = vmul.f32 %v513, %v521
    %v526 = vld [vmem:[#allocation7] ss:$4 sm:$0xf]
    %v528 = vlaneseq
    %v529 = vshrl.u32 %v528, 7
    %v530 = vsub.s32 0, %v529
    %v531 = vrot.slane %v526, %v530
    %v532 = vlaneseq
    %v533 = vshrl.u32 %v532, 7
    %v534 = vsub.s32 1, %v533
    %v535 = vrot.slane %v526, %v534
    %v536 = vlaneseq
    %v537 = vshrl.u32 %v536, 7
    %v538 = vsub.s32 2, %v537
    %v539 = vrot.slane %v526, %v538
    %v540 = vlaneseq
    %v541 = vshrl.u32 %v540, 7
    %v542 = vsub.s32 3, %v541
    %v543 = vrot.slane %v526, %v542
    %v548 = vmul.f32 %v522, %v531
    %v549 = vmul.f32 %v523, %v535
    %v550 = vmul.f32 %v524, %v539
    %v551 = vmul.f32 %v525, %v543
    %s552 = scalar_lea.vmem [#allocation7], 1
    %v553 = vld [vmem:[%s552] ss:$4 sm:$0xf]
    %v555 = vlaneseq
    %v556 = vshrl.u32 %v555, 7
    %v557 = vsub.s32 0, %v556
    %v558 = vrot.slane %v553, %v557
    %v559 = vlaneseq
    %v560 = vshrl.u32 %v559, 7
    %v561 = vsub.s32 1, %v560
    %v562 = vrot.slane %v553, %v561
    %v563 = vlaneseq
    %v564 = vshrl.u32 %v563, 7
    %v565 = vsub.s32 2, %v564
    %v566 = vrot.slane %v553, %v565
    %v567 = vlaneseq
    %v568 = vshrl.u32 %v567, 7
    %v569 = vsub.s32 3, %v568
    %v570 = vrot.slane %v553, %v569
    %v575 = vadd.f32 %v548, %v558
    %v576 = vadd.f32 %v549, %v562
    %v577 = vadd.f32 %v550, %v566
    %v578 = vadd.f32 %v551, %v570
    %s579 = scalar_lea.vmem [#allocation7], 2
    %v580 = vld [vmem:[%s579] ss:$4 sm:$0xf]
    %vm581 = vcmp.gt.f32.partialorder %v575, 0.0
    %vm582 = vcmp.gt.f32.partialorder %v576, 0.0
    %vm583 = vcmp.gt.f32.partialorder %v577, 0.0
    %vm584 = vcmp.gt.f32.partialorder %v578, 0.0
    %v586 = vlaneseq
    %v587 = vshrl.u32 %v586, 7
    %v588 = vsub.s32 0, %v587
    %v589 = vrot.slane %v580, %v588
    %v590 = vlaneseq
    %v591 = vshrl.u32 %v590, 7
    %v592 = vsub.s32 1, %v591
    %v593 = vrot.slane %v580, %v592
    %v594 = vlaneseq
    %v595 = vshrl.u32 %v594, 7
    %v596 = vsub.s32 2, %v595
    %v597 = vrot.slane %v580, %v596
    %v598 = vlaneseq
    %v599 = vshrl.u32 %v598, 7
    %v600 = vsub.s32 3, %v599
    %v601 = vrot.slane %v580, %v600
    %v606 = vmul.f32 %v589, %v575
    %v607 = vmul.f32 %v593, %v576
    %v608 = vmul.f32 %v597, %v577
    %v609 = vmul.f32 %v601, %v578
    %v610 = vsel %vm581, %v575, %v606
    %v611 = vsel %vm582, %v576, %v607
    %v612 = vsel %vm583, %v577, %v608
    %v613 = vsel %vm584, %v578, %v609
    %v614 = vpack.c.bf16 %v610, %v610
    %v615 = vpack.c.bf16 %v611, %v611
    %v616 = vpack.c.bf16 %v612, %v612
    %v617 = vpack.c.bf16 %v613, %v613
    %v618 = vld [vmem:[#allocation5] sm:$0xff]
    %v619 = vld [vmem:[#allocation5 + $0x8] sm:$0xff]
    %v620 = vld [vmem:[#allocation5 + $0x10] sm:$0xff]
    %v621 = vld [vmem:[#allocation5 + $0x18] sm:$0xff]
    %v622 = vld [vmem:[#allocation5 + $0x20] sm:$0xff]
    %v623 = vld [vmem:[#allocation5 + $0x28] sm:$0xff]
    %v624 = vld [vmem:[#allocation5 + $0x30] sm:$0xff]
    %v625 = vld [vmem:[#allocation5 + $0x38] sm:$0xff]
    %v626 = vld [vmem:[#allocation5 + $0x40] sm:$0xff]
    %v627 = vld [vmem:[#allocation5 + $0x48] sm:$0xff]
    %v628 = vld [vmem:[#allocation5 + $0x50] sm:$0xff]
    %v629 = vld [vmem:[#allocation5 + $0x58] sm:$0xff]
    %v630 = vld [vmem:[#allocation5 + $0x60] sm:$0xff]
    %v631 = vld [vmem:[#allocation5 + $0x68] sm:$0xff]
    %v632 = vld [vmem:[#allocation5 + $0x70] sm:$0xff]
    %v633 = vld [vmem:[#allocation5 + $0x78] sm:$0xff]
    %v634 = vunpack.c.l.s8.bf16 %v618
    %v635 = vunpack.c.h.s8.bf16 %v618
    %v636 = vunpack.c.l.s8.bf16 %v619
    %v637 = vunpack.c.h.s8.bf16 %v619
    %v638 = vunpack.c.l.s8.bf16 %v620
    %v639 = vunpack.c.h.s8.bf16 %v620
    %v640 = vunpack.c.l.s8.bf16 %v621
    %v641 = vunpack.c.h.s8.bf16 %v621
    %v642 = vunpack.c.l.s8.bf16 %v622
    %v643 = vunpack.c.h.s8.bf16 %v622
    %v644 = vunpack.c.l.s8.bf16 %v623
    %v645 = vunpack.c.h.s8.bf16 %v623
    %v646 = vunpack.c.l.s8.bf16 %v624
    %v647 = vunpack.c.h.s8.bf16 %v624
    %v648 = vunpack.c.l.s8.bf16 %v625
    %v649 = vunpack.c.h.s8.bf16 %v625
    %v650 = vunpack.c.l.s8.bf16 %v626
    %v651 = vunpack.c.h.s8.bf16 %v626
    %v652 = vunpack.c.l.s8.bf16 %v627
    %v653 = vunpack.c.h.s8.bf16 %v627
    %v654 = vunpack.c.l.s8.bf16 %v628
    %v655 = vunpack.c.h.s8.bf16 %v628
    %v656 = vunpack.c.l.s8.bf16 %v629
    %v657 = vunpack.c.h.s8.bf16 %v629
    %v658 = vunpack.c.l.s8.bf16 %v630
    %v659 = vunpack.c.h.s8.bf16 %v630
    %v660 = vunpack.c.l.s8.bf16 %v631
    %v661 = vunpack.c.h.s8.bf16 %v631
    %v662 = vunpack.c.l.s8.bf16 %v632
    %v663 = vunpack.c.h.s8.bf16 %v632
    %v664 = vunpack.c.l.s8.bf16 %v633
    %v665 = vunpack.c.h.s8.bf16 %v633
    %666 = vmatprep.subr.bf16.mxu0 0
    %667 = vmatpush1.bf16.msra.mxu0 %v634
    %668 = vmatprep.subr.bf16.mxu0 0
    %669 = vmatpush1.bf16.msra.mxu0 %v635
    %670 = vmatprep.subr.bf16.mxu0 0
    %671 = vmatpush1.bf16.msra.mxu0 %v636
    %672 = vmatprep.subr.bf16.mxu0 0
    %673 = vmatpush1.bf16.msra.mxu0 %v637
    %674 = vmatprep.subr.bf16.mxu0 0
    %675 = vmatpush1.bf16.msra.mxu0 %v638
    %676 = vmatprep.subr.bf16.mxu0 0
    %677 = vmatpush1.bf16.msra.mxu0 %v639
    %678 = vmatprep.subr.bf16.mxu0 0
    %679 = vmatpush1.bf16.msra.mxu0 %v640
    %680 = vmatprep.subr.bf16.mxu0 0
    %681 = vmatpush1.bf16.msra.mxu0 %v641
    %682 = vmatprep.subr.bf16.mxu0 0
    %683 = vmatpush1.bf16.msra.mxu0 %v642
    %684 = vmatprep.subr.bf16.mxu0 0
    %685 = vmatpush1.bf16.msra.mxu0 %v643
    %686 = vmatprep.subr.bf16.mxu0 0
    %687 = vmatpush1.bf16.msra.mxu0 %v644
    %688 = vmatprep.subr.bf16.mxu0 0
    %689 = vmatpush1.bf16.msra.mxu0 %v645
    %690 = vmatprep.subr.bf16.mxu0 0
    %691 = vmatpush1.bf16.msra.mxu0 %v646
    %692 = vmatprep.subr.bf16.mxu0 0
    %693 = vmatpush1.bf16.msra.mxu0 %v647
    %694 = vmatprep.subr.bf16.mxu0 0
    %695 = vmatpush1.bf16.msra.mxu0 %v648
    %696 = vmatprep.subr.bf16.mxu0 0
    %697 = vmatpush1.bf16.msra.mxu0 %v649
    %698 = vmatprep.mubr.bf16.mxu0 %v615
    %699 = vmatmul.mubr.bf16.gmra.mrb[0].mxu0 %v614
    %v700 = vpop.f32.mrb[0].mxu0
    %v701 = vadd.f32 0.0, %v700
    %v702 = vpop.f32.mrb[0].mxu0
    %v703 = vpop.f32.mrb[0].mxu0
    %v704 = vpop.f32.mrb[0].mxu0
    %705 = vdwg.mxu0
    %706 = vmatprep.subr.bf16.mxu0 0
    %707 = vmatpush1.bf16.msra.mxu0 %v650
    %708 = vmatprep.subr.bf16.mxu0 0
    %709 = vmatpush1.bf16.msra.mxu0 %v651
    %710 = vmatprep.subr.bf16.mxu0 0
    %711 = vmatpush1.bf16.msra.mxu0 %v652
    %712 = vmatprep.subr.bf16.mxu0 0
    %713 = vmatpush1.bf16.msra.mxu0 %v653
    %714 = vmatprep.subr.bf16.mxu0 0
    %715 = vmatpush1.bf16.msra.mxu0 %v654
    %716 = vmatprep.subr.bf16.mxu0 0
    %717 = vmatpush1.bf16.msra.mxu0 %v655
    %718 = vmatprep.subr.bf16.mxu0 0
    %719 = vmatpush1.bf16.msra.mxu0 %v656
    %720 = vmatprep.subr.bf16.mxu0 0
    %721 = vmatpush1.bf16.msra.mxu0 %v657
    %722 = vmatprep.subr.bf16.mxu0 0
    %723 = vmatpush1.bf16.msra.mxu0 %v658
    %724 = vmatprep.subr.bf16.mxu0 0
    %725 = vmatpush1.bf16.msra.mxu0 %v659
    %726 = vmatprep.subr.bf16.mxu0 0
    %727 = vmatpush1.bf16.msra.mxu0 %v660
    %728 = vmatprep.subr.bf16.mxu0 0
    %729 = vmatpush1.bf16.msra.mxu0 %v661
    %730 = vmatprep.subr.bf16.mxu0 0
    %731 = vmatpush1.bf16.msra.mxu0 %v662
    %732 = vmatprep.subr.bf16.mxu0 0
    %733 = vmatpush1.bf16.msra.mxu0 %v663
    %734 = vmatprep.subr.bf16.mxu0 0
    %735 = vmatpush1.bf16.msra.mxu0 %v664
    %736 = vmatprep.subr.bf16.mxu0 0
    %737 = vmatpush1.bf16.msra.mxu0 %v665
    %738 = vmatprep.mubr.bf16.mxu0 %v617
    %739 = vmatmul.mubr.bf16.gmra.mrb[0].mxu0 %v616
    %v740 = vpop.f32.mrb[0].mxu0
    %v741 = vadd.f32 %v701, %v740
    %v742 = vpop.f32.mrb[0].mxu0
    %v743 = vpop.f32.mrb[0].mxu0
    %v744 = vpop.f32.mrb[0].mxu0
    %745 = vdwg.mxu0
    %v746 = vrot.slane %v741, 4
    %v747 = vadd.f32 %v741, %v746
    %v748 = vrot.slane %v747, 2
    %v749 = vadd.f32 %v747, %v748
    %v750 = vrot.slane %v749, 1
    %v751 = vadd.f32 %v749, %v750
    %v752 = vmul.f32 %v751, %v461
    %v753 = vmul.f32 %v741, %v741
    %v754 = vrot.slane %v753, 4
    %v755 = vadd.f32 %v753, %v754
    %v756 = vrot.slane %v755, 2
    %v757 = vadd.f32 %v755, %v756
    %v758 = vrot.slane %v757, 1
    %v759 = vadd.f32 %v757, %v758
    %v760 = vmul.f32 %v759, %v461
    %v761 = vmul.f32 %v752, %v752
    %v762 = vsub.f32 %v760, %v761
    %v763 = vmax.f32 %v762, 0.0
    %v764 = vsub.f32 %v741, %v752
    %v765 = vadd.f32 %v763, 1e-05
    %v766 = vrsqrt.pop %v765
    %v767 = vmul.f32 %v764, %v766
    %v768 = vld [vmem:[%s3] sm:$0x1]
    %v769 = vlaneseq
    %v770 = vshrl.u32 %v769, 7
    %v771 = vsub.s32 0, %v770
    %v772 = vrot.slane %v768, %v771
    %v773 = vmul.f32 %v767, %v772
    %v774 = vld [vmem:[%s3 + $0x1] sm:$0x1]
    %v775 = vlaneseq
    %v776 = vshrl.u32 %v775, 7
    %v777 = vsub.s32 0, %v776
    %v778 = vrot.slane %v774, %v777
    %v779 = vadd.f32 %v773, %v778
    %780 = vst [vmem:[#allocation10] sm:$0xff] %v779
    // Predicated region
    $region38: #{tpu_custom_call.1} parent=1 // pred_check
      _
    $region39: #{tpu_custom_call.1} parent=1 // pred_check_branch
      %782 = sbr.rel (0) target = $region41
    $region40: #{tpu_custom_call.1} parent=1 // pred_region
      %s784 = ssub.s32 128, 128
      %785 = vsyncadd [#allocation4], %s784
      %s787 = sshll.u32 [#allocation10], 4
      %s788 = int_to_ptr.vmem [resolvable:$true] %s787
      %790 = dma.vmem_to_hbm [thread:$0]  %s788, 128, %s5, [#allocation4]
    $region41: #{tpu_custom_call.1} parent=1 // pred_fallthru
      _
    // Predicated region
    $region42: #{tpu_custom_call.1} parent=1 // pred_check
      _
    $region43: #{tpu_custom_call.1} parent=1 // pred_check_branch
      %792 = sbr.rel (0) target = $region45
    $region44: #{tpu_custom_call.1} parent=1 // pred_region
      %793 = dma.done [#allocation4], 128
    $region45: #{tpu_custom_call.1} parent=1 // pred_fallthru
      _
    %794 = vsyncpa [#allocation3], 1
    %795 = vsyncpa [#allocation6], 1
    %796 = vsyncpa [#allocation9], 1
    %797 = vsyncpa [#allocation4], 1

</llo_original>
